<compile_context>
chip_gen: v6e
topology: v6e:2x2x1
jax: 0.10.0
libtpu: 0.0.40
codegen_flags: <defaults>
</compile_context>

<pallas_src>
import jax
import jax.numpy as jnp
from jax.experimental import pallas as pl
from jax.experimental.pallas import tpu as pltpu


def _mean_pool_kernel(h_ref, m_ref, o_ref, msum_ref):
    # h_ref:    (TB, TS, TH) tile of last_hidden_state (native dtype)
    # m_ref:    (TB, TS)     tile of attention_mask (narrow dtype)
    # o_ref:    (TB, TH)     float32 output tile; resident across the s axis,
    #                        used directly as the sum_embeddings accumulator
    # msum_ref: (TB, 1)      float32 mask-sum accumulator (VMEM scratch)
    s = pl.program_id(2)

    @pl.when(s == 0)
    def _init():
        o_ref[...] = jnp.zeros_like(o_ref)
        msum_ref[...] = jnp.zeros_like(msum_ref)

    # Single cast of the mask to f32; multiply + sequence-tile reduction in f32
    # (exact for int/float masks, no bf16 VALU work on v5e).
    m_f32 = m_ref[...].astype(jnp.float32)                        # (TB, TS)
    h_f32 = h_ref[...].astype(jnp.float32)                        # (TB, TS, TH)
    # TODO(synk): an MXU contraction (einsum('bs,bsh->bh')) would avoid the
    # lane->sublane mask relayout, but a batched rank-2 x rank-3 dot_general is
    # not reliably lowered by Mosaic; the VALU path is nowhere near the HBM
    # roofline bottleneck of this mem-bound kernel.
    o_ref[...] += jnp.sum(h_f32 * m_f32[:, :, None], axis=1)      # (TB, TH)
    msum_ref[...] += jnp.sum(m_f32, axis=1, keepdims=True)        # (TB, 1)

    @pl.when(s == pl.num_programs(2) - 1)
    def _finalize():
        denom = jnp.maximum(msum_ref[...], 1e-9)    # torch.clamp(min=1e-9)
        o_ref[...] = o_ref[...] * pl.reciprocal(denom, approx=False)


def _vmem_capacity_bytes():
    """Physical VMEM of the local TPU generation (fallback: v7x-safe 64 MiB)."""
    try:
        info = pltpu.get_tpu_info()
        cap = int(getattr(info, "vmem_capacity_bytes", 0))
        if cap > 0:
            return cap
    except Exception:
        pass
    return 64 * 1024 * 1024


def _block_bytes(tb, ts, th, h_item, m_item):
    """Worst-case per-step VMEM: double-buffered blocks + in-kernel f32 temps."""
    return (2 * tb * ts * (th * h_item + m_item)   # double-buffered input blocks
            + 2 * tb * ts * th * 4                 # f32 cast + product temporaries
            + 2 * tb * th * 4                      # double-buffered f32 output
            + tb * 128 * 4)                        # mask-sum scratch (lane-padded)


def _choose_tiles(B, S, H, h_item, m_item, budget_bytes):
    """Pick (TB, TS, TH) so that the per-step VMEM footprint fits the budget."""
    # Batch tile: minimize batch padding (padded rows cost real HBM bandwidth),
    # tie-break toward larger TB (amortizes the ~0.35 us per-grid-step cost).
    TB = min((32, 16, 8), key=lambda t: (-(-B // t) * t, -t))

    # Hidden-tile candidates: multiples of 128 dividing H, else the full H.
    if H >= 128 and H % 128 == 0:
        th_options = sorted((t for t in range(128, H + 1, 128) if H % t == 0),
                            reverse=True)
    else:
        th_options = [H]   # block dim == full array dim is always legal

    def fits(ts, th):
        return _block_bytes(TB, ts, th, h_item, m_item) <= budget_bytes

    def pick_ts(th):
        if fits(S, th):
            return S                                # whole sequence, one s-step
        ts = max(128, (S // 128) * 128)             # mask lane dim -> mult of 128
        while ts > 128 and not fits(ts, th):
            ts = max(128, ((ts // 2) // 128) * 128)
        return ts

    # Prefer the largest hidden tile (>= 1 KiB contiguous DMA rows); shrink the
    # sequence tile first, fall back to smaller hidden tiles only if needed.
    TH, TS = th_options[-1], 128
    for th in th_options:
        ts = pick_ts(th)
        if fits(ts, th):
            TH, TS = th, ts
            break

    # v7x megacore: ensure the "parallel" part of the grid has >= 2 steps.
    if (-(-B // TB)) * (H // TH) < 2:
        for th in th_options:
            if th < TH and fits(TS, th):
                TH = th
                break

    return TB, TS, TH


def mean_pooling(last_hidden_state, attention_mask):
    """Masked mean pooling over the sequence axis.

    Args:
      last_hidden_state: [B, S, H] array (f32 / bf16 / ...).
      attention_mask:    [B, S] array (bool / int / float 0-1 mask).
    Returns:
      [B, H] float32 array of mean embeddings.
    """
    B, S, H = last_hidden_state.shape
    if attention_mask.dtype == jnp.bool_:
        attention_mask = attention_mask.astype(jnp.int8)

    h_item = jnp.dtype(last_hidden_state.dtype).itemsize
    m_item = jnp.dtype(attention_mask.dtype).itemsize

    # Generation-aware block budget: ~45% of physical VMEM (v5e/v6e: 128 MiB,
    # v7x: 64 MiB), leaving headroom for Mosaic internal scratch.
    vmem_cap = _vmem_capacity_bytes()
    budget = int(vmem_cap * 0.45)
    TB, TS, TH = _choose_tiles(B, S, H, h_item, m_item, budget)

    B_pad = -(-B // TB) * TB
    S_pad = -(-S // TS) * TS
    if B_pad != B or S_pad != S:
        # Padded tokens carry mask == 0 -> contribute nothing; fully padded
        # batch rows produce 0 / 1e-9 = 0 and are sliced away below.
        last_hidden_state = jnp.pad(
            last_hidden_state, ((0, B_pad - B), (0, S_pad - S), (0, 0)))
        attention_mask = jnp.pad(
            attention_mask, ((0, B_pad - B), (0, S_pad - S)))

    grid = (B_pad // TB, H // TH, S_pad // TS)

    block_total = _block_bytes(TB, TS, TH, h_item, m_item)
    vmem_limit = int(min(vmem_cap * 0.85,                    # stay under physical
                         max(32 * 1024 * 1024, block_total + (8 << 20))))

    cost = pl.CostEstimate(
        flops=2 * B_pad * S_pad * H,
        transcendentals=B_pad * (H // TH),
        bytes_accessed=(B_pad * S_pad * H * h_item
                        + B_pad * S_pad * m_item
                        + B_pad * H * 4),
    )

    out = pl.pallas_call(
        _mean_pool_kernel,
        out_shape=jax.ShapeDtypeStruct((B_pad, H), jnp.float32),
        grid_spec=pltpu.PrefetchScalarGridSpec(
            num_scalar_prefetch=0,
            grid=grid,
            in_specs=[
                pl.BlockSpec((TB, TS, TH), lambda b, h, s: (b, s, h)),
                pl.BlockSpec((TB, TS), lambda b, h, s: (b, s)),
            ],
            out_specs=pl.BlockSpec((TB, TH), lambda b, h, s: (b, h)),
            scratch_shapes=[pltpu.VMEM((TB, 1), jnp.float32)],
        ),
        compiler_params=pltpu.CompilerParams(
            dimension_semantics=("parallel", "parallel", "arbitrary"),
            vmem_limit_bytes=vmem_limit),
        cost_estimate=cost,
    )(last_hidden_state, attention_mask)

    return out[:B] if B_pad != B else out


def _reference(last_hidden_state, attention_mask):
    """Pure-JAX reference matching the PyTorch forward exactly."""
    m = attention_mask[..., None].astype(jnp.float32)
    m = jnp.broadcast_to(m, last_hidden_state.shape)
    sum_emb = jnp.sum(last_hidden_state.astype(jnp.float32) * m, axis=1)
    sum_mask = jnp.clip(jnp.sum(m, axis=1), 1e-9, None)
    return sum_emb / sum_mask


if __name__ == "__main__":
    key = jax.random.PRNGKey(0)
    k1, k2 = jax.random.split(key)

    B, S, H = 2, 8, 32
    last_hidden_state = jax.random.normal(k1, (B, S, H), dtype=jnp.float32)
    # 0/1 attention mask; ensure at least some tokens are active.
    attention_mask = (jax.random.uniform(k2, (B, S)) > 0.3).astype(jnp.int32)

    out = mean_pooling(last_hidden_state, attention_mask)
    out = jax.block_until_ready(out)

    ref = _reference(last_hidden_state, attention_mask)
    assert out.shape == (B, H)
    assert jnp.allclose(out, ref, atol=1e-5, rtol=1e-5), "mismatch vs reference"

    print("KERNEL_OK")
</pallas_src>

<mosaic_0001>
module attributes {stable_mosaic.version = 11 : i64} {
  func.func @_mean_pool_kernel(%arg0: i32, %arg1: i32, %arg2: i32, %arg3: memref<8x8x32xf32, #tpu.memory_space<vmem>>, %arg4: memref<8x8xi32, #tpu.memory_space<vmem>>, %arg5: memref<8x32xf32, #tpu.memory_space<vmem>>, %arg6: memref<8x1xf32, #tpu.memory_space<vmem>>) attributes {dimension_semantics = [#tpu.dimension_semantics<parallel>, #tpu.dimension_semantics<parallel>, #tpu.dimension_semantics<arbitrary>], iteration_bounds = array<i64: 1, 1, 1>, scalar_prefetch = 0 : i64, scratch_operands = 1 : i64, tpu.core_type = #tpu.core_type<tc>, window_params = [{transform_indices = @transform_0, window_bounds = array<i64: 8, 8, 32>}, {transform_indices = @transform_1, window_bounds = array<i64: 8, 8>}, {transform_indices = @transform_2, window_bounds = array<i64: 8, 32>}]} {
    %c0_i32 = arith.constant 0 : i32
    %0 = arith.cmpi eq, %arg2, %c0_i32 : i32
    %1 = arith.extui %0 : i1 to i32
    %c0_i32_0 = arith.constant 0 : i32
    %2 = arith.cmpi ne, %1, %c0_i32_0 : i32
    scf.if %2 {
      %cst_16 = arith.constant 0.000000e+00 : f32
      %21 = vector.broadcast %cst_16 : f32 to vector<8x32xf32>
      %c0_17 = arith.constant 0 : index
      %c0_18 = arith.constant 0 : index
      %22 = vector.load %arg5[%c0_17, %c0_18] : memref<8x32xf32, #tpu.memory_space<vmem>>, vector<8x32xf32>
      tpu.vector_store %arg5[%c0_17, %c0_18], %21 {strides = array<i32>} : memref<8x32xf32, #tpu.memory_space<vmem>>, vector<8x32xf32>,
      %cst_19 = arith.constant 0.000000e+00 : f32
      %23 = vector.broadcast %cst_19 : f32 to vector<8x1xf32>
      %c0_20 = arith.constant 0 : index
      %c0_21 = arith.constant 0 : index
      %24 = vector.load %arg6[%c0_20, %c0_21] : memref<8x1xf32, #tpu.memory_space<vmem>>, vector<8x1xf32>
      tpu.vector_store %arg6[%c0_20, %c0_21], %23 {strides = array<i32>} : memref<8x1xf32, #tpu.memory_space<vmem>>, vector<8x1xf32>,
    } else {
    }
    %c0 = arith.constant 0 : index
    %c0_1 = arith.constant 0 : index
    %3 = vector.load %arg4[%c0, %c0_1] : memref<8x8xi32, #tpu.memory_space<vmem>>, vector<8x8xi32>
    %4 = arith.sitofp %3 : vector<8x8xi32> to vector<8x8xf32>
    %c0_2 = arith.constant 0 : index
    %c0_3 = arith.constant 0 : index
    %c0_4 = arith.constant 0 : index
    %5 = vector.load %arg3[%c0_2, %c0_3, %c0_4] : memref<8x8x32xf32, #tpu.memory_space<vmem>>, vector<8x8x32xf32>
    %c0_5 = arith.constant 0 : index
    %c0_6 = arith.constant 0 : index
    %6 = vector.load %arg5[%c0_5, %c0_6] : memref<8x32xf32, #tpu.memory_space<vmem>>, vector<8x32xf32>
    %7 = vector.shape_cast %4 : vector<8x8xf32> to vector<8x8x1xf32>
    %8 = vector.broadcast %7 : vector<8x8x1xf32> to vector<8x8x32xf32>
    %9 = arith.mulf %5, %8 : vector<8x8x32xf32>
    %cst = arith.constant dense<0.000000e+00> : vector<8x32xf32>
    %10 = vector.multi_reduction <add>, %9, %cst [1] : vector<8x8x32xf32> to vector<8x32xf32>
    %11 = arith.addf %6, %10 : vector<8x32xf32>
    %c0_7 = arith.constant 0 : index
    %c0_8 = arith.constant 0 : index
    %12 = vector.load %arg5[%c0_7, %c0_8] : memref<8x32xf32, #tpu.memory_space<vmem>>, vector<8x32xf32>
    tpu.vector_store %arg5[%c0_7, %c0_8], %11 {strides = array<i32>} : memref<8x32xf32, #tpu.memory_space<vmem>>, vector<8x32xf32>,
    %c0_9 = arith.constant 0 : index
    %c0_10 = arith.constant 0 : index
    %13 = vector.load %arg6[%c0_9, %c0_10] : memref<8x1xf32, #tpu.memory_space<vmem>>, vector<8x1xf32>
    %cst_11 = arith.constant dense<0.000000e+00> : vector<8xf32>
    %14 = vector.multi_reduction <add>, %4, %cst_11 [1] : vector<8x8xf32> to vector<8xf32>
    %15 = vector.shape_cast %14 : vector<8xf32> to vector<8x1xf32>
    %16 = arith.addf %13, %15 : vector<8x1xf32>
    %c0_12 = arith.constant 0 : index
    %c0_13 = arith.constant 0 : index
    %17 = vector.load %arg6[%c0_12, %c0_13] : memref<8x1xf32, #tpu.memory_space<vmem>>, vector<8x1xf32>
    tpu.vector_store %arg6[%c0_12, %c0_13], %16 {strides = array<i32>} : memref<8x1xf32, #tpu.memory_space<vmem>>, vector<8x1xf32>,
    %c0_i32_14 = arith.constant 0 : i32
    %18 = arith.cmpi eq, %arg2, %c0_i32_14 : i32
    %19 = arith.extui %18 : i1 to i32
    %c0_i32_15 = arith.constant 0 : i32
    %20 = arith.cmpi ne, %19, %c0_i32_15 : i32
    scf.if %20 {
      %c0_16 = arith.constant 0 : index
      %c0_17 = arith.constant 0 : index
      %21 = vector.load %arg6[%c0_16, %c0_17] : memref<8x1xf32, #tpu.memory_space<vmem>>, vector<8x1xf32>
      %cst_18 = arith.constant 9.99999971E-10 : f32
      %22 = vector.broadcast %cst_18 : f32 to vector<8x1xf32>
      %23 = arith.maximumf %21, %22 : vector<8x1xf32>
      %c0_19 = arith.constant 0 : index
      %c0_20 = arith.constant 0 : index
      %24 = vector.load %arg5[%c0_19, %c0_20] : memref<8x32xf32, #tpu.memory_space<vmem>>, vector<8x32xf32>
      %25 = tpu.reciprocal %23 : vector<8x1xf32> -> vector<8x1xf32>
      %26 = vector.broadcast %25 : vector<8x1xf32> to vector<8x32xf32>
      %27 = arith.mulf %24, %26 : vector<8x32xf32>
      %c0_21 = arith.constant 0 : index
      %c0_22 = arith.constant 0 : index
      %28 = vector.load %arg5[%c0_21, %c0_22] : memref<8x32xf32, #tpu.memory_space<vmem>>, vector<8x32xf32>
      tpu.vector_store %arg5[%c0_21, %c0_22], %27 {strides = array<i32>} : memref<8x32xf32, #tpu.memory_space<vmem>>, vector<8x32xf32>,
    } else {
    }
    return
  }
  func.func @transform_0(%arg0: i32, %arg1: i32, %arg2: i32) -> (i32, i32, i32) {
    %c0_i32 = arith.constant 0 : i32
    return %arg0, %arg2, %arg1 : i32, i32, i32
  }
  func.func @transform_1(%arg0: i32, %arg1: i32, %arg2: i32) -> (i32, i32) {
    %c0_i32 = arith.constant 0 : i32
    return %arg0, %arg2 : i32, i32
  }
  func.func @transform_2(%arg0: i32, %arg1: i32, %arg2: i32) -> (i32, i32) {
    %c0_i32 = arith.constant 0 : i32
    return %arg0, %arg1 : i32, i32
  }
}

</mosaic_0001>

<llo_original>
// kernel: tpu_custom_call.1
$region0: #{tpu_custom_call.1}
  #allocation0 [shape = 'u32[]', space=smem, size = 0x4, offset = 0x4, fixed_abs, tag = 'smem constant byte address 0x4 - core index']
  #allocation1 [shape = 'u32[144,128]{1,0:T(1,128)}', space=vmem, size = 0x12000, scoped, tag = 'internal scratch']
  #allocation2 [shape = 'f32[8,1]{1,0:T(8,128)}', space=vmem, size = 0x1000, scoped, tag = 'scratch operand']
  %s0 = inlined_call_operand.hbm [shape: f32[8,8,32], index: 0, kind: input, shape index: {}]
  %s1 = inlined_call_operand.hbm [shape: s32[8,8], index: 1, kind: input, shape index: {}]
  %s2 = inlined_call_operand.hbm [shape: f32[8,32], index: 2, kind: output, shape index: {}]
  %s3 = sld [smem:[#allocation0]]
  $region34: #{tpu_custom_call.1} parent=0
    _
  %s5 = ssub.s32 1, %s3
  %s6 = scalar_select 0, %s5, %s3
  $region1: #{tpu_custom_call.1} parent=0
    #allocation3 [shape = 'u8[32768]{0}', space=vmem, size = 0x8000, scoped, tag = 'input window, operand 0, single buffered']
    #allocation4 [shape = 's32[1]{0}', space=sflag, size = 0x4, scoped, tag = 'scoped memory for tpu_custom_call.1']
    #allocation5 [shape = 's32[1]{0}', space=sflag, size = 0x4, scoped, tag = 'scoped memory for tpu_custom_call.1']
    #allocation6 [shape = 'u8[4096]{0}', space=vmem, size = 0x1000, scoped, tag = 'input window, operand 1, single buffered']
    #allocation7 [shape = 's32[1]{0}', space=sflag, size = 0x4, scoped, tag = 'scoped memory for tpu_custom_call.1']
    #allocation8 [shape = 'u8[4096]{0}', space=vmem, size = 0x1000, scoped, tag = 'output window, operand 0, single buffered']
    %7 = vsyncpa [#allocation4], 0
    %8 = vsyncpa [#allocation7], 0
    %9 = vsyncpa [#allocation5], 0
    // Predicated region
    $region2: #{tpu_custom_call.1} parent=1 // pred_check
      _
    $region3: #{tpu_custom_call.1} parent=1 // pred_check_branch
      %11 = sbr.rel (0) target = $region5
    $region4: #{tpu_custom_call.1} parent=1 // pred_region
      %s13 = ssub.s32 1024, 1024
      %14 = vsyncadd [#allocation4], %s13
      %s15 = sshll.u32 [#allocation3], 4
      %s16 = int_to_ptr.vmem [resolvable:$true] %s15
      %21 = dma.hbm_to_vmem [thread:$0]  %s0, 1024, %s16, [#allocation4], 128, 128, 8
    $region5: #{tpu_custom_call.1} parent=1 // pred_fallthru
      _
    // Predicated region
    $region6: #{tpu_custom_call.1} parent=1 // pred_check
      _
    $region7: #{tpu_custom_call.1} parent=1 // pred_check_branch
      %23 = sbr.rel (0) target = $region9
    $region8: #{tpu_custom_call.1} parent=1 // pred_region
      %s25 = ssub.s32 128, 128
      %26 = vsyncadd [#allocation7], %s25
      %s28 = sshll.u32 [#allocation6], 4
      %s29 = int_to_ptr.vmem [resolvable:$true] %s28
      %31 = dma.hbm_to_vmem [thread:$0]  %s1, 128, %s29, [#allocation7]
    $region9: #{tpu_custom_call.1} parent=1 // pred_fallthru
      _
    // Predicated region
    $region10: #{tpu_custom_call.1} parent=1 // pred_check
      _
    $region11: #{tpu_custom_call.1} parent=1 // pred_check_branch
      %33 = sbr.rel (0) target = $region13
    $region12: #{tpu_custom_call.1} parent=1 // pred_region
      %34 = dma.done [#allocation4], 1024
    $region13: #{tpu_custom_call.1} parent=1 // pred_fallthru
      _
    // Predicated region
    $region14: #{tpu_custom_call.1} parent=1 // pred_check
      _
    $region15: #{tpu_custom_call.1} parent=1 // pred_check_branch
      %36 = sbr.rel (0) target = $region17
    $region16: #{tpu_custom_call.1} parent=1 // pred_region
      %37 = dma.done [#allocation7], 128
    $region17: #{tpu_custom_call.1} parent=1 // pred_fallthru
      _
    %p38 = scmp.eq.s32.totalorder 0, 0
    // Predicated region
    $region18: #{tpu_custom_call.1} parent=1 // pred_check
      %p39 = pneg %p38
    $region19: #{tpu_custom_call.1} parent=1 // pred_check_branch
      %41 = sbr.rel (%p39) target = $region21
    $region20: #{tpu_custom_call.1} parent=1 // pred_region
      %vm42 = vcmask 261120
      %43 = vst.msk [vmem:[#allocation8] sm:$0xff] %vm42, 0.0
      %vm44 = vcmask 7168
      %45 = vst.msk [vmem:[#allocation2] sm:$0xff] %vm44, 0.0
    $region21: #{tpu_custom_call.1} parent=1 // pred_fallthru
      _
    %v46 = vld [vmem:[#allocation6] sm:$0xff]
    %v47 = vcvt.s32.f32 %v46
    %v48 = vld [vmem:[#allocation3] sm:$0xff]
    %v49 = vld [vmem:[#allocation3 + $0x8] sm:$0xff]
    %v50 = vld [vmem:[#allocation3 + $0x10] sm:$0xff]
    %v51 = vld [vmem:[#allocation3 + $0x18] sm:$0xff]
    %v52 = vld [vmem:[#allocation3 + $0x20] sm:$0xff]
    %v53 = vld [vmem:[#allocation3 + $0x28] sm:$0xff]
    %v54 = vld [vmem:[#allocation3 + $0x30] sm:$0xff]
    %v55 = vld [vmem:[#allocation3 + $0x38] sm:$0xff]
    %v56 = vld [vmem:[#allocation8] sm:$0xff]
    %v57 = vlaneseq
    %v58 = vshrl.u32 %v57, 7
    %v59 = vsub.s32 0, %v58
    %v60 = vrot.slane %v47, %v59
    %62 = vbcast.lane.b32.xlu0 %v60, 256
    %v63 = vpop.permute.xlu0 %62
    %v64 = vlaneseq
    %v65 = vshrl.u32 %v64, 7
    %v66 = vsub.s32 1, %v65
    %v67 = vrot.slane %v47, %v66
    %69 = vbcast.lane.b32.xlu0 %v67, 256
    %v70 = vpop.permute.xlu0 %69
    %v71 = vlaneseq
    %v72 = vshrl.u32 %v71, 7
    %v73 = vsub.s32 2, %v72
    %v74 = vrot.slane %v47, %v73
    %76 = vbcast.lane.b32.xlu0 %v74, 256
    %v77 = vpop.permute.xlu0 %76
    %v78 = vlaneseq
    %v79 = vshrl.u32 %v78, 7
    %v80 = vsub.s32 3, %v79
    %v81 = vrot.slane %v47, %v80
    %83 = vbcast.lane.b32.xlu0 %v81, 256
    %v84 = vpop.permute.xlu0 %83
    %v85 = vlaneseq
    %v86 = vshrl.u32 %v85, 7
    %v87 = vsub.s32 4, %v86
    %v88 = vrot.slane %v47, %v87
    %90 = vbcast.lane.b32.xlu0 %v88, 256
    %v91 = vpop.permute.xlu0 %90
    %v92 = vlaneseq
    %v93 = vshrl.u32 %v92, 7
    %v94 = vsub.s32 5, %v93
    %v95 = vrot.slane %v47, %v94
    %97 = vbcast.lane.b32.xlu0 %v95, 256
    %v98 = vpop.permute.xlu0 %97
    %v99 = vlaneseq
    %v100 = vshrl.u32 %v99, 7
    %v101 = vsub.s32 6, %v100
    %v102 = vrot.slane %v47, %v101
    %104 = vbcast.lane.b32.xlu0 %v102, 256
    %v105 = vpop.permute.xlu0 %104
    %v106 = vlaneseq
    %v107 = vshrl.u32 %v106, 7
    %v108 = vsub.s32 7, %v107
    %v109 = vrot.slane %v47, %v108
    %111 = vbcast.lane.b32.xlu0 %v109, 256
    %v112 = vpop.permute.xlu0 %111
    %v113 = vmul.f32 %v48, %v63
    %v114 = vmul.f32 %v49, %v70
    %v115 = vmul.f32 %v50, %v77
    %v116 = vmul.f32 %v51, %v84
    %v117 = vmul.f32 %v52, %v91
    %v118 = vmul.f32 %v53, %v98
    %v119 = vmul.f32 %v54, %v105
    %v120 = vmul.f32 %v55, %v112
    %vm121 = vcmask 261120
    %v122 = vsel %vm121, %v113, 0.0
    %v123 = vrot.slane %v122, 4
    %v124 = vadd.f32 %v122, %v123
    %v125 = vrot.slane %v124, 2
    %v126 = vadd.f32 %v124, %v125
    %v127 = vrot.slane %v126, 1
    %v128 = vadd.f32 %v126, %v127
    %v129 = vsel %vm121, %v114, 0.0
    %v130 = vrot.slane %v129, 4
    %v131 = vadd.f32 %v129, %v130
    %v132 = vrot.slane %v131, 2
    %v133 = vadd.f32 %v131, %v132
    %v134 = vrot.slane %v133, 1
    %v135 = vadd.f32 %v133, %v134
    %v136 = vsel %vm121, %v115, 0.0
    %v137 = vrot.slane %v136, 4
    %v138 = vadd.f32 %v136, %v137
    %v139 = vrot.slane %v138, 2
    %v140 = vadd.f32 %v138, %v139
    %v141 = vrot.slane %v140, 1
    %v142 = vadd.f32 %v140, %v141
    %v143 = vsel %vm121, %v116, 0.0
    %v144 = vrot.slane %v143, 4
    %v145 = vadd.f32 %v143, %v144
    %v146 = vrot.slane %v145, 2
    %v147 = vadd.f32 %v145, %v146
    %v148 = vrot.slane %v147, 1
    %v149 = vadd.f32 %v147, %v148
    %v150 = vsel %vm121, %v117, 0.0
    %v151 = vrot.slane %v150, 4
    %v152 = vadd.f32 %v150, %v151
    %v153 = vrot.slane %v152, 2
    %v154 = vadd.f32 %v152, %v153
    %v155 = vrot.slane %v154, 1
    %v156 = vadd.f32 %v154, %v155
    %v157 = vsel %vm121, %v118, 0.0
    %v158 = vrot.slane %v157, 4
    %v159 = vadd.f32 %v157, %v158
    %v160 = vrot.slane %v159, 2
    %v161 = vadd.f32 %v159, %v160
    %v162 = vrot.slane %v161, 1
    %v163 = vadd.f32 %v161, %v162
    %v164 = vsel %vm121, %v119, 0.0
    %v165 = vrot.slane %v164, 4
    %v166 = vadd.f32 %v164, %v165
    %v167 = vrot.slane %v166, 2
    %v168 = vadd.f32 %v166, %v167
    %v169 = vrot.slane %v168, 1
    %v170 = vadd.f32 %v168, %v169
    %v171 = vsel %vm121, %v120, 0.0
    %v172 = vrot.slane %v171, 4
    %v173 = vadd.f32 %v171, %v172
    %v174 = vrot.slane %v173, 2
    %v175 = vadd.f32 %v173, %v174
    %v176 = vrot.slane %v175, 1
    %v177 = vadd.f32 %v175, %v176
    %vm186 = vcmask 1041409
    %v187 = vsel %vm186, %v135, %v128
    %vm188 = vcmask 1042434
    %v189 = vsel %vm188, %v142, %v187
    %vm190 = vcmask 1043459
    %v191 = vsel %vm190, %v149, %v189
    %vm192 = vcmask 1044484
    %v193 = vsel %vm192, %v156, %v191
    %vm194 = vcmask 1045509
    %v195 = vsel %vm194, %v163, %v193
    %vm196 = vcmask 1046534
    %v197 = vsel %vm196, %v170, %v195
    %vm198 = vcmask 1047559
    %v199 = vsel %vm198, %v177, %v197
    %v201 = vadd.f32 %v56, %v199
    %202 = vst.msk [vmem:[#allocation8] sm:$0xff] %vm121, %v201
    %v203 = vld [vmem:[#allocation2] sm:$0xff]
    %vm204 = vcmask 64512
    %v205 = vsel %vm204, %v47, 0.0
    %206 = vadd.xlane.f32.xlu0 %v205
    %v207 = vpop.xlane.xlu0 %206
    %v208 = vadd.f32 %v203, %v207
    %vm209 = vcmask 7168
    %210 = vst.msk [vmem:[#allocation2] sm:$0xff] %vm209, %v208
    // Predicated region
    $region22: #{tpu_custom_call.1} parent=1 // pred_check
      %p211 = pneg %p38
    $region23: #{tpu_custom_call.1} parent=1 // pred_check_branch
      %213 = sbr.rel (%p211) target = $region25
    $region24: #{tpu_custom_call.1} parent=1 // pred_region
      %v214 = vld [vmem:[#allocation2] sm:$0xff]
      %v215 = vmax.f32 %v214, 1e-09
      %v216 = vld [vmem:[#allocation8] sm:$0xff]
      %v217 = vrcp.pop %v215
      %219 = vset.pattern.permute.xlu0 0
      %220 = vperm.xlu0 %219, %v217
      %v221 = vpop.permute.xlu0 %220
      %v223 = vmul.f32 %v216, %v221
      %224 = vst.msk [vmem:[#allocation8] sm:$0xff] %vm121, %v223
    $region25: #{tpu_custom_call.1} parent=1 // pred_fallthru
      _
    // Predicated region
    $region26: #{tpu_custom_call.1} parent=1 // pred_check
      _
    $region27: #{tpu_custom_call.1} parent=1 // pred_check_branch
      %226 = sbr.rel (0) target = $region29
    $region28: #{tpu_custom_call.1} parent=1 // pred_region
      %s228 = ssub.s32 128, 128
      %229 = vsyncadd [#allocation5], %s228
      %s231 = sshll.u32 [#allocation8], 4
      %s232 = int_to_ptr.vmem [resolvable:$true] %s231
      %234 = dma.vmem_to_hbm [thread:$0]  %s232, 128, %s2, [#allocation5]
    $region29: #{tpu_custom_call.1} parent=1 // pred_fallthru
      _
    // Predicated region
    $region30: #{tpu_custom_call.1} parent=1 // pred_check
      _
    $region31: #{tpu_custom_call.1} parent=1 // pred_check_branch
      %236 = sbr.rel (0) target = $region33
    $region32: #{tpu_custom_call.1} parent=1 // pred_region
      %237 = dma.done [#allocation5], 128
    $region33: #{tpu_custom_call.1} parent=1 // pred_fallthru
      _
    %238 = vsyncpa [#allocation4], 1
    %239 = vsyncpa [#allocation7], 1
    %240 = vsyncpa [#allocation5], 1

</llo_original>
